<compile_context>
chip_gen: v7x
topology: tpu7x:2x2x1
jax: 0.10.0
libtpu: 0.0.40
codegen_flags: <defaults>
</compile_context>

<pallas_src>
import math

import jax
import jax.numpy as jnp
from jax.experimental import pallas as pl
from jax.experimental.pallas import tpu as pltpu


# ----------------------------- tuning constants -----------------------------
# Per-tile byte budget. Double-buffered in + out => ~4x this (~32 MiB) of
# VMEM, safe on v5e/v6e (128 MiB physical) and v7x (64 MiB physical).
_TARGET_TILE_BYTES = 8 * 1024 * 1024
# Keep at least this many grid steps for large inputs (v7x 2-TC sharding and
# pipeline depth); small inputs naturally collapse to fewer steps.
_MIN_GRID_STEPS = 8
# Explicit scoped-VMEM limit: overrides the 16/32 MiB scoped defaults while
# leaving headroom under v7x's 64 MiB physical VMEM.
_VMEM_LIMIT_BYTES = 48 * 1024 * 1024
# Tile (elements, multiple of 1024) for the 1-D fallback path.
_TILE_1D = 512 * 1024

_COMPILER_PARAMS = pltpu.CompilerParams(
    # Independent copy tiles: lets v7x shard the grid across its 2 TensorCores
    # ("parallel" vs "arbitrary" is measured noise on single-TC v5e/v6e).
    dimension_semantics=("parallel",),
    vmem_limit_bytes=_VMEM_LIMIT_BYTES,
)


def _copy_kernel(x_ref, o_ref):
    # Identity copy of the current lane-dense VMEM tile (pipeline is pure DMA).
    o_ref[...] = x_ref[...]


def _sublane_multiple(itemsize):
    # Sub-32-bit dtypes pack along sublanes: f32 -> 8, bf16/f16 -> 16, i8 -> 32.
    return max(8, 32 // int(itemsize))


def _plan_2d(numel, itemsize):
    """Pick a lane-dense (rows, cols, tile_rows) plan for the flat buffer.

    cols: widest multiple of 128 (<= 16384) that divides numel, so all stores
          are unmasked lane-dense `vst`s.
    tile_rows: multiple of the dtype's sublane packing, sized to ~8 MiB per
          tile while keeping >= _MIN_GRID_STEPS grid steps for large inputs.
          The grid uses cdiv, so tile_rows need NOT divide rows (ragged last
          block is masked by Pallas).

    Returns None if numel is not divisible by 128 (caller uses the tiled 1-D
    fallback).
    """
    sub = _sublane_multiple(itemsize)

    col_cap = min(numel, 16384)
    cols = 0
    c = (col_cap // 128) * 128
    while c >= 128:
        if numel % c == 0:
            cols = c
            break
        c -= 128
    if cols == 0:
        return None

    rows = numel // cols
    if rows <= sub:
        # Full first dim: single block, always a legal block shape.
        return rows, cols, rows

    row_bytes = cols * itemsize
    budget_rows = max(sub, (_TARGET_TILE_BYTES // row_bytes) // sub * sub)
    steps_rows = -(-rows // _MIN_GRID_STEPS)          # ceil(rows / MIN_STEPS)
    steps_rows = max(sub, -(-steps_rows // sub) * sub)  # round up to sublane mult
    tile_rows = min(budget_rows, steps_rows)
    if tile_rows >= rows:
        tile_rows = rows                               # full first dim
    return rows, cols, tile_rows


def flatten_forward(x):
    """Pallas equivalent of Flatten.forward.

    Returns x viewed as (-1, prod(x.shape[:-1])) == (x.shape[-1], prod(leading)),
    materialized through a tiled, pipelined streaming copy.
    """
    rows_out = x.shape[-1]                 # the inferred -1 dimension
    leading = math.prod(x.shape[:-1])      # prod(x.shape[:-1])
    numel = rows_out * leading
    itemsize = jnp.dtype(x.dtype).itemsize

    plan = _plan_2d(numel, itemsize)

    if plan is not None:
        rows, cols, tile_rows = plan
        x2d = jnp.reshape(x, (rows, cols))             # metadata-only
        grid = (pl.cdiv(rows, tile_rows),)
        out = pl.pallas_call(
            _copy_kernel,
            out_shape=jax.ShapeDtypeStruct((rows, cols), x.dtype),
            grid=grid,
            in_specs=[pl.BlockSpec((tile_rows, cols), lambda i: (i, 0))],
            out_specs=pl.BlockSpec((tile_rows, cols), lambda i: (i, 0)),
            compiler_params=_COMPILER_PARAMS,
        )(x2d)
    else:
        # numel not divisible by 128: tiled 1-D streaming copy (cdiv grid,
        # masked tail) instead of one full-array block.
        x1d = jnp.reshape(x, (numel,))                 # metadata-only
        if numel <= _TILE_1D:
            block, grid = (numel,), (1,)
        else:
            block, grid = (_TILE_1D,), (pl.cdiv(numel, _TILE_1D),)
        out = pl.pallas_call(
            _copy_kernel,
            out_shape=jax.ShapeDtypeStruct((numel,), x.dtype),
            grid=grid,
            in_specs=[pl.BlockSpec(block, lambda i: (i,))],
            out_specs=pl.BlockSpec(block, lambda i: (i,)),
            compiler_params=_COMPILER_PARAMS,
        )(x1d)

    # Final logical shape — pure bookkeeping; flat order is unchanged.
    # NOTE: matches the given module's x.view(-1, prod(x.shape[:-1])), i.e.
    # (last_dim, prod(leading)), which is NOT the usual nn.Flatten contract.
    return jnp.reshape(out, (rows_out, leading))


if __name__ == "__main__":
    key = jax.random.PRNGKey(0)

    # Main case: NCHW input, batch=2, channels=4, spatial=16x16, f32.
    x = jax.random.normal(key, (2, 4, 16, 16), dtype=jnp.float32)
    y = jax.block_until_ready(flatten_forward(x))
    ref = jnp.reshape(x, (16, 2 * 4 * 16))
    assert y.shape == ref.shape, y.shape
    assert jnp.array_equal(y, ref)

    # bf16 exercises the dtype-aware sublane multiple.
    xb = jax.random.normal(jax.random.PRNGKey(2), (2, 4, 16, 16), dtype=jnp.bfloat16)
    yb = jax.block_until_ready(flatten_forward(xb))
    assert jnp.array_equal(yb, jnp.reshape(xb, (16, 128)))

    # Medium case exercises the multi-step cdiv grid (rows=32, tile_rows=8).
    xm = jax.random.normal(jax.random.PRNGKey(3), (8, 16, 32, 128), dtype=jnp.float32)
    ym = jax.block_until_ready(flatten_forward(xm))
    assert jnp.array_equal(ym, jnp.reshape(xm, (128, 8 * 16 * 32)))

    # Odd shape (numel not divisible by 128) exercises the tiled 1-D fallback.
    x2 = jax.random.normal(jax.random.PRNGKey(1), (2, 3, 5, 16), dtype=jnp.float32)
    y2 = jax.block_until_ready(flatten_forward(x2))
    assert y2.shape == (16, 30), y2.shape
    assert jnp.array_equal(y2, jnp.reshape(x2, (16, 30)))

    print("KERNEL_OK")
</pallas_src>

<mosaic_0001>
module attributes {stable_mosaic.version = 11 : i64} {
  func.func @_copy_kernel(%arg0: i32, %arg1: memref<1x2048xf32, #tpu.memory_space<vmem>>, %arg2: memref<1x2048xf32, #tpu.memory_space<vmem>>) attributes {dimension_semantics = [#tpu.dimension_semantics<parallel>], iteration_bounds = array<i64: 1>, scalar_prefetch = 0 : i64, scratch_operands = 0 : i64, tpu.core_type = #tpu.core_type<tc>, window_params = [{transform_indices = @transform_0, window_bounds = array<i64: 1, 2048>}, {transform_indices = @transform_1, window_bounds = array<i64: 1, 2048>}]} {
    %c0 = arith.constant 0 : index
    %c0_0 = arith.constant 0 : index
    %0 = vector.load %arg1[%c0, %c0_0] : memref<1x2048xf32, #tpu.memory_space<vmem>>, vector<1x2048xf32>
    %c0_1 = arith.constant 0 : index
    %c0_2 = arith.constant 0 : index
    %1 = vector.load %arg2[%c0_1, %c0_2] : memref<1x2048xf32, #tpu.memory_space<vmem>>, vector<1x2048xf32>
    tpu.vector_store %arg2[%c0_1, %c0_2], %0 {strides = array<i32>} : memref<1x2048xf32, #tpu.memory_space<vmem>>, vector<1x2048xf32>,
    return
  }
  func.func @transform_0(%arg0: i32) -> (i32, i32) {
    %c0_i32 = arith.constant 0 : i32
    %c0_i32_0 = arith.constant 0 : i32
    return %arg0, %c0_i32 : i32, i32
  }
  func.func @transform_1(%arg0: i32) -> (i32, i32) {
    %c0_i32 = arith.constant 0 : i32
    %c0_i32_0 = arith.constant 0 : i32
    return %arg0, %c0_i32 : i32, i32
  }
}

</mosaic_0001>

<llo_original>
// kernel: tpu_custom_call.1
$region0: #{tpu_custom_call.1}
  #allocation0 [shape = 'u32[]', space=smem, size = 0x4, offset = 0x4, fixed_abs, tag = 'smem constant byte address 0x4 - core index']
  #allocation1 [shape = 'u32[144,128]{1,0:T(1,128)}', space=vmem, size = 0x12000, scoped, tag = 'internal scratch']
  %s0 = inlined_call_operand.hbm [shape: f32[1,2048], index: 0, kind: input, shape index: {}]
  %s1 = inlined_call_operand.hbm [shape: f32[1,2048], index: 1, kind: output, shape index: {}]
  %s2 = sld [smem:[#allocation0]]
  $region18: #{tpu_custom_call.1} parent=0
    _
  %s4 = ssub.s32 1, %s2
  %s5 = scalar_select 0, %s4, %s2
  $region1: #{tpu_custom_call.1} parent=0
    #allocation2 [shape = 'u8[8192]{0}', space=vmem, size = 0x2000, scoped, tag = 'input window, operand 0, single buffered']
    #allocation3 [shape = 's32[1]{0}', space=sflag, size = 0x4, scoped, tag = 'scoped memory for tpu_custom_call.1']
    #allocation4 [shape = 's32[1]{0}', space=sflag, size = 0x4, scoped, tag = 'scoped memory for tpu_custom_call.1']
    #allocation5 [shape = 'u8[8192]{0}', space=vmem, size = 0x2000, scoped, tag = 'output window, operand 0, single buffered']
    %6 = vsyncpa [#allocation3], 0
    %7 = vsyncpa [#allocation4], 0
    // Predicated region
    $region2: #{tpu_custom_call.1} parent=1 // pred_check
      _
    $region3: #{tpu_custom_call.1} parent=1 // pred_check_branch
      %9 = sbr.rel (0) target = $region5
    $region4: #{tpu_custom_call.1} parent=1 // pred_region
      %s11 = ssub.s32 256, 256
      %12 = vsyncadd [#allocation3], %s11
      %s14 = sshll.u32 [#allocation2], 4
      %s15 = int_to_ptr.vmem [resolvable:$true] %s14
      %17 = dma.hbm_to_vmem [thread:$0]  %s0, 256, %s15, [#allocation3]
    $region5: #{tpu_custom_call.1} parent=1 // pred_fallthru
      _
    // Predicated region
    $region6: #{tpu_custom_call.1} parent=1 // pred_check
      _
    $region7: #{tpu_custom_call.1} parent=1 // pred_check_branch
      %19 = sbr.rel (0) target = $region9
    $region8: #{tpu_custom_call.1} parent=1 // pred_region
      %20 = dma.done [#allocation3], 256
    $region9: #{tpu_custom_call.1} parent=1 // pred_fallthru
      _
    %v21 = vld [vmem:[#allocation2] sm:$0xff]
    %v22 = vld [vmem:[#allocation2 + $0x8] sm:$0xff]
    %23 = vst [vmem:[#allocation5] sm:$0xff] %v21
    %24 = vst [vmem:[#allocation5 + $0x8] sm:$0xff] %v22
    // Predicated region
    $region10: #{tpu_custom_call.1} parent=1 // pred_check
      _
    $region11: #{tpu_custom_call.1} parent=1 // pred_check_branch
      %26 = sbr.rel (0) target = $region13
    $region12: #{tpu_custom_call.1} parent=1 // pred_region
      %s28 = ssub.s32 256, 256
      %29 = vsyncadd [#allocation4], %s28
      %s31 = sshll.u32 [#allocation5], 4
      %s32 = int_to_ptr.vmem [resolvable:$true] %s31
      %34 = dma.vmem_to_hbm [thread:$0]  %s32, 256, %s1, [#allocation4]
    $region13: #{tpu_custom_call.1} parent=1 // pred_fallthru
      _
    // Predicated region
    $region14: #{tpu_custom_call.1} parent=1 // pred_check
      _
    $region15: #{tpu_custom_call.1} parent=1 // pred_check_branch
      %36 = sbr.rel (0) target = $region17
    $region16: #{tpu_custom_call.1} parent=1 // pred_region
      %37 = dma.done [#allocation4], 256
    $region17: #{tpu_custom_call.1} parent=1 // pred_fallthru
      _
    %38 = vsyncpa [#allocation3], 1
    %39 = vsyncpa [#allocation4], 1

</llo_original>
